<compile_context>
chip_gen: v6e
topology: v6e:2x2x1
jax: 0.10.0
libtpu: 0.0.40
codegen_flags: <defaults>
</compile_context>

<pallas_src>
import jax
import jax.numpy as jnp
from jax.experimental import pallas as pl
from jax.experimental.pallas import tpu as pltpu


_LANE = 128              # vreg lane width; last dim of every block
_MAX_BLOCK_ROWS = 4096   # (4096, 128) f32 block = 2 MiB per buffer


def _passthrough_kernel(x_ref, o_ref):
    # Identity body.  Quantizer subclasses replace this with clamp/round/scale
    # (compute in f32, pl.reciprocal(approx=True) for scale inversion).
    o_ref[...] = x_ref[...]


def _round_up(v, m):
    return (v + m - 1) // m * m


def _identity_forward_impl(x):
    orig_shape = x.shape
    total = x.size
    dtype = x.dtype

    if total == 0:
        return x

    # Sublane granularity by dtype packing: f32 -> 8, bf16 -> 16, int8/fp8 -> 32.
    sublane = max(8, 32 // max(1, dtype.itemsize))

    # Flatten to a lane-dense, sublane-full slab (rows, 128).
    rows = _round_up(pl.cdiv(total, _LANE), sublane)
    block_rows = min(_MAX_BLOCK_ROWS, rows)
    rows = _round_up(rows, block_rows)          # grid divides evenly
    padded_total = rows * _LANE

    flat = x.reshape(-1)
    if padded_total != total:
        flat = jnp.pad(flat, (0, padded_total - total))
    slab = flat.reshape(rows, _LANE)

    out_slab = pl.pallas_call(
        _passthrough_kernel,
        out_shape=jax.ShapeDtypeStruct((rows, _LANE), dtype),
        grid=(rows // block_rows,),
        in_specs=[pl.BlockSpec((block_rows, _LANE), lambda i: (i, 0))],
        out_specs=pl.BlockSpec((block_rows, _LANE), lambda i: (i, 0)),
        # Identity: let the output reuse the input's HBM buffer.
        input_output_aliases={0: 0},
        compiler_params=pltpu.CompilerParams(
            # Tiles are independent -> shard across v7x's 2 TensorCores.
            dimension_semantics=("parallel",),
            # Headroom beyond the v5e 16 MiB scoped default; at most ~8 MiB of
            # double-buffered blocks are live, safe on v7x (64 MiB physical).
            vmem_limit_bytes=32 * 1024 * 1024,
        ),
    )(slab)

    out = out_slab.reshape(-1)
    if padded_total != total:
        out = out[:total]
    return out.reshape(orig_shape)


# jit the whole path so pad/reshape/slice fuse and the aliased pallas input is
# an intermediate (clean buffer donation).
_identity_forward = jax.jit(_identity_forward_impl)


class Quantizer:
    """JAX/Pallas port of the abstract PyTorch `Quantizer` base class.

    The PyTorch reference's forward() raises NotImplementedError; the only
    well-defined semantics at this level is the identity pass-through used by
    the no-op subclass (IdentityQuan).  The Pallas kernel above is the tiled,
    lane-dense skeleton concrete quantizer subclasses reuse by swapping the
    kernel body.
    """

    def __init__(self, bit):
        self.bit = bit  # configuration only; unused by the identity forward

    def init_from(self, x, *args, **kwargs):
        pass

    def init_from_wht(self, x):
        pass

    def init_from_act(self, x):
        pass

    def __call__(self, x):
        return self.forward(x)

    def forward(self, x):
        # TODO(synk): PyTorch base-class forward raises NotImplementedError;
        # concrete quantization math belongs to subclasses.  This runs the
        # identity skeleton kernel (no-op quantization).
        return _identity_forward(x)


if __name__ == "__main__":
    key = jax.random.PRNGKey(0)
    # Small NCHW input consistent with a conv-style activation tensor.
    x = jax.random.normal(key, (2, 4, 16, 16), dtype=jnp.float32)

    quantizer = Quantizer(bit=8)
    y = quantizer(x)
    y = jax.block_until_ready(y)

    # Identity semantics check.
    assert y.shape == x.shape
    assert y.dtype == x.dtype
    assert bool(jnp.allclose(y, x)), "identity pass-through mismatch"

    print("KERNEL_OK")
</pallas_src>

<mosaic_0001>
module attributes {stable_mosaic.version = 11 : i64} {
  func.func @_passthrough_kernel(%arg0: i32, %arg1: memref<16x128xf32, #tpu.memory_space<vmem>>, %arg2: memref<16x128xf32, #tpu.memory_space<vmem>>) attributes {dimension_semantics = [#tpu.dimension_semantics<parallel>], iteration_bounds = array<i64: 1>, scalar_prefetch = 0 : i64, scratch_operands = 0 : i64, tpu.core_type = #tpu.core_type<tc>, window_params = [{transform_indices = @transform_0, window_bounds = array<i64: 16, 128>}, {transform_indices = @transform_1, window_bounds = array<i64: 16, 128>}]} {
    %c0 = arith.constant 0 : index
    %c0_0 = arith.constant 0 : index
    %0 = vector.load %arg1[%c0, %c0_0] : memref<16x128xf32, #tpu.memory_space<vmem>>, vector<16x128xf32>
    %c0_1 = arith.constant 0 : index
    %c0_2 = arith.constant 0 : index
    %1 = vector.load %arg2[%c0_1, %c0_2] : memref<16x128xf32, #tpu.memory_space<vmem>>, vector<16x128xf32>
    tpu.vector_store %arg2[%c0_1, %c0_2], %0 {strides = array<i32>} : memref<16x128xf32, #tpu.memory_space<vmem>>, vector<16x128xf32>,
    return
  }
  func.func @transform_0(%arg0: i32) -> (i32, i32) {
    %c0_i32 = arith.constant 0 : i32
    %c0_i32_0 = arith.constant 0 : i32
    return %arg0, %c0_i32 : i32, i32
  }
  func.func @transform_1(%arg0: i32) -> (i32, i32) {
    %c0_i32 = arith.constant 0 : i32
    %c0_i32_0 = arith.constant 0 : i32
    return %arg0, %c0_i32 : i32, i32
  }
}

</mosaic_0001>

<llo_original>
// kernel: _identity_forward_impl.1
$region0: #{_identity_forward_impl.1}
  #allocation0 [shape = 'u32[]', space=smem, size = 0x4, offset = 0x4, fixed_abs, tag = 'smem constant byte address 0x4 - core index']
  #allocation1 [shape = 'u32[144,128]{1,0:T(1,128)}', space=vmem, size = 0x12000, scoped, tag = 'internal scratch']
  %s0 = inlined_call_operand.vmem [shape: f32[16,128], index: 0, kind: input, shape index: {}, may-alias: {0,1}]
  %s1 = inlined_call_operand.vmem [shape: f32[16,128], index: 1, kind: output, shape index: {}, may-alias: {0,1}]
  %s2 = sld [smem:[#allocation0]]
  $region14: #{_identity_forward_impl.1} parent=0
    _
  %s4 = ssub.s32 1, %s2
  %s5 = scalar_select 0, %s4, %s2
  // Predicated region
  $region2: #{_identity_forward_impl.1} parent=0 // pred_check
    _
  $region3: #{_identity_forward_impl.1} parent=0 // pred_check_branch
    %7 = sbr.rel (0) target = $region5
  $region4: #{_identity_forward_impl.1} parent=0 // pred_region
    _
  $region5: #{_identity_forward_impl.1} parent=0 // pred_fallthru
    _
  %v8 = vld [vmem:[%s0] sm:$0xff]
  %v9 = vld [vmem:[%s0 + $0x8] sm:$0xff]
  %10 = vst [vmem:[%s1] sm:$0xff] %v8
  %11 = vst [vmem:[%s1 + $0x8] sm:$0xff] %v9
  // Predicated region
  $region6: #{_identity_forward_impl.1} parent=0 // pred_check
    _
  $region7: #{_identity_forward_impl.1} parent=0 // pred_check_branch
    %13 = sbr.rel (0) target = $region9
  $region8: #{_identity_forward_impl.1} parent=0 // pred_region
    _
  $region9: #{_identity_forward_impl.1} parent=0 // pred_fallthru
    _
  // Predicated region
  $region10: #{_identity_forward_impl.1} parent=0 // pred_check
    _
  $region11: #{_identity_forward_impl.1} parent=0 // pred_check_branch
    %15 = sbr.rel (0) target = $region13
  $region12: #{_identity_forward_impl.1} parent=0 // pred_region
    _
  $region13: #{_identity_forward_impl.1} parent=0 // pred_fallthru
    _

</llo_original>
